<compile_context>
chip_gen: v7x
topology: tpu7x:2x2x1
jax: 0.10.0
libtpu: 0.0.40
codegen_flags: <defaults>
</compile_context>

<pallas_src>
import functools

import jax
import jax.numpy as jnp
import numpy as np
from jax.experimental import pallas as pl
from jax.experimental.pallas import tpu as pltpu

ALPHA = 0.17
IGNORE_INDEX = -100
CLAMP_MAX = 160.0


def _ce_mse_kernel(wt_ref, tgt_ref, logit_ref, out_ref,
                   acc_num, acc_sq, carry_ref, *,
                   t_total, has_tail, transpose_in_kernel):
    # wt_ref:    [1, 1, Tt] f32  precomputed weight[target] * valid
    # tgt_ref:   [1, 1, Tt] i32  raw targets (may contain -100 / tail garbage)
    # logit_ref: [1, Tt, C] (btc) or [1, C, Tt] (bct), native dtype
    # out_ref:   [1, 1, 128] f32 per-batch partials: lane0=sum(w*nll), lane1=sum(sq)
    # scratch:   acc_num/acc_sq [1, Tt] f32 lane accumulators; carry [C, 1] f32
    t_idx = pl.program_id(1)
    n_t = pl.num_programs(1)

    @pl.when(t_idx == 0)
    def _init():
        acc_num[...] = jnp.zeros_like(acc_num)
        acc_sq[...] = jnp.zeros_like(acc_sq)

    if transpose_in_kernel:
        # [Tt, C] block straight from the [B, T, C] input; swap to [C, Tt] so
        # classes sit on sublanes and time on lanes.
        x = jnp.transpose(logit_ref[0].astype(jnp.float32), (1, 0))
    else:
        x = logit_ref[0].astype(jnp.float32)            # already [C, Tt]
    C, Tt = x.shape

    # log-softmax over the class (sublane) axis; each lane (= timestep) is
    # independent, so any garbage in out-of-range tail lanes stays in its lane.
    m = jnp.max(x, axis=0, keepdims=True)               # [1, Tt]
    z = x - m
    lse = jnp.log(jnp.sum(jnp.exp(z), axis=0, keepdims=True))
    lsm = z - lse                                        # [C, Tt]

    lane = jax.lax.broadcasted_iota(jnp.int32, (1, Tt), 1)

    # ---- weighted cross-entropy numerator ----
    # w_t already folds in the class weight and the ignore_index mask, so only
    # the target-class log-prob has to be picked out here (one cmp + select).
    cls_id = jax.lax.broadcasted_iota(jnp.int32, (C, 1), 0)
    picked = jnp.where(cls_id == tgt_ref[0], lsm, 0.0)   # [C, Tt]
    nll = -jnp.sum(picked, axis=0, keepdims=True)        # [1, Tt]
    num_t = wt_ref[0] * nll                               # [1, Tt]

    # ---- MS-TCN smoothing: clamped squared temporal diff of log-softmax ----
    # Forward value only; PyTorch detaches the t-1 operand (grad-only effect).
    # TODO(synk): custom VJP with stop_gradient on the t-1 term for training parity.
    if Tt > 1:
        # previous-timestep column for lane 0: the carry from the previous tile,
        # or lsm[:, 0] itself on the first tile (makes that diff exactly 0).
        prev_col = jnp.where(t_idx == 0, lsm[:, 0:1], carry_ref[...])   # [C, 1]
        if Tt % 128 == 0:
            shifted = pltpu.roll(lsm, shift=1, axis=1)                  # lane shift (XLU)
            shifted = jnp.where(lane == 0, prev_col, shifted)
        else:
            # tiny single-tile sequences (Tt == T < 128)
            shifted = jnp.concatenate([prev_col, lsm[:, :Tt - 1]], axis=1)
        d = lsm - shifted
        sq_t = jnp.sum(jnp.minimum(d * d, CLAMP_MAX), axis=0, keepdims=True)  # [1, Tt]
    else:
        sq_t = jnp.zeros((1, Tt), jnp.float32)

    if has_tail:
        # Only the last time tile can be partial; mask on the class-reduced rows
        # (also blocks any NaN/Inf that garbage tail lanes produced upstream).
        in_range = (t_idx * Tt + lane) < t_total          # [1, Tt]
        num_t = jnp.where(in_range, num_t, 0.0)
        sq_t = jnp.where(in_range, sq_t, 0.0)

    acc_num[...] += num_t
    acc_sq[...] += sq_t
    carry_ref[...] = lsm[:, Tt - 1:Tt]

    @pl.when(t_idx == n_t - 1)
    def _finalize():
        lane128 = jax.lax.broadcasted_iota(jnp.int32, (1, 128), 1)
        num = jnp.sum(acc_num[...])
        sq = jnp.sum(acc_sq[...])
        out_ref[0] = jnp.where(lane128 == 0, num,
                               jnp.where(lane128 == 1, sq, 0.0))


def _pick_time_tile(T, C, itemsize, budget_bytes):
    """Largest time tile (multiple of 128, <= 8192) whose VMEM working set
    (double-buffered logits block + f32 intermediates + accumulators) fits the
    budget; the whole sequence when it fits."""
    c_lane = max(C, 128)                 # lane padding of the [Tt, C] input block
    c_sub = ((C + 7) // 8) * 8           # sublane padding of the [C, Tt] arrays
    per_t = (2 * c_lane * itemsize       # double-buffered logits stream
             + c_lane * 4                # f32 upcast before the in-kernel swap
             + 6 * c_sub * 4             # live f32 [C, Tt] intermediates
             + 192)                      # wt/tgt streams + per-lane accumulators
    budget_t = max(budget_bytes // per_t, 128)
    if T <= budget_t:
        return T
    return int(min((budget_t // 128) * 128, 8192))


def ce_plus_mse(logits, targets, weight, *, alpha=ALPHA, logits_layout="btc",
                time_tile=None, vmem_budget_bytes=20 * 1024 * 1024):
    """MS-TCN CE+MSE loss.

    logits:  [B, T, C] (logits_layout="btc", PyTorch module layout) or
             [B, C, T] (logits_layout="bct", conv1d-native, fastest path).
    targets: [B, T] int (ignore_index = -100).
    weight:  [C] float class weights.
    """
    if logits_layout == "btc":
        B, T, C = logits.shape
    elif logits_layout == "bct":
        B, C, T = logits.shape
    else:
        raise ValueError(f"unknown logits_layout: {logits_layout!r}")

    targets = targets.astype(jnp.int32)
    w = weight.astype(jnp.float32)
    valid = targets != IGNORE_INDEX
    w_bt = jnp.where(valid, w[jnp.where(valid, targets, 0)], 0.0)    # [B, T] f32
    ce_den = jnp.sum(w_bt)                                           # CE denominator

    if time_tile is None:
        t_tile = _pick_time_tile(T, C, logits.dtype.itemsize, vmem_budget_bytes)
    else:
        t_tile = T if T <= time_tile else max(128, (time_tile // 128) * 128)
    n_t = pl.cdiv(T, t_tile)
    has_tail = (T % t_tile) != 0

    wt_b1t = w_bt.reshape(B, 1, T)
    tgt_b1t = targets.reshape(B, 1, T)

    if logits_layout == "btc":
        logits_spec = pl.BlockSpec((1, t_tile, C), lambda b, t: (b, t, 0))
        transpose_in_kernel = True
    else:
        logits_spec = pl.BlockSpec((1, C, t_tile), lambda b, t: (b, 0, t))
        transpose_in_kernel = False

    kernel = functools.partial(
        _ce_mse_kernel, t_total=T, has_tail=has_tail,
        transpose_in_kernel=transpose_in_kernel)

    partials = pl.pallas_call(
        kernel,
        out_shape=jax.ShapeDtypeStruct((B, 1, 128), jnp.float32),
        grid=(B, n_t),
        in_specs=[
            pl.BlockSpec((1, 1, t_tile), lambda b, t: (b, 0, t)),  # per-step CE weight
            pl.BlockSpec((1, 1, t_tile), lambda b, t: (b, 0, t)),  # targets
            logits_spec,                                           # logits tile
        ],
        out_specs=pl.BlockSpec((1, 1, 128), lambda b, t: (b, 0, 0)),
        scratch_shapes=[
            pltpu.VMEM((1, t_tile), jnp.float32),   # per-lane sum(w * nll)
            pltpu.VMEM((1, t_tile), jnp.float32),   # per-lane sum(clamped sq diff)
            pltpu.VMEM((C, 1), jnp.float32),        # previous tile's last lsm column
        ],
        compiler_params=pltpu.CompilerParams(
            dimension_semantics=("parallel", "arbitrary"),
            vmem_limit_bytes=32 * 1024 * 1024,
        ),
    )(wt_b1t, tgt_b1t, logits)

    ce_num = jnp.sum(partials[:, 0, 0])
    sq_sum = jnp.sum(partials[:, 0, 1])

    # nn.CrossEntropyLoss(weight, ignore_index=-100, reduction='mean')
    loss_ce = ce_num / ce_den
    # torch.mean over the full [B, C, T-1] clamped-squared-diff tensor
    # (T == 1 -> 0/0 = NaN, matching torch.mean of an empty tensor)
    loss_mse = sq_sum / (B * C * (T - 1))
    return {
        "loss_ce": loss_ce,
        "loss_mse": loss_mse,
        "loss_total": loss_ce + alpha * loss_mse,
    }


def _reference(logits_btc, targets, weight, alpha=ALPHA):
    """Pure-JAX forward reference matching the PyTorch module."""
    logits = logits_btc.astype(jnp.float32)
    lsm = jax.nn.log_softmax(logits, axis=-1)                  # [B, T, C]
    valid = targets != IGNORE_INDEX
    tgt = jnp.where(valid, targets, 0).astype(jnp.int32)
    nll = -jnp.take_along_axis(lsm, tgt[..., None], axis=-1)[..., 0]
    w = weight.astype(jnp.float32)[tgt]
    w = jnp.where(valid, w, 0.0)
    loss_ce = jnp.sum(w * nll) / jnp.sum(w)
    d = lsm[:, 1:, :] - lsm[:, :-1, :]
    loss_mse = jnp.mean(jnp.minimum(d * d, CLAMP_MAX))
    return loss_ce, loss_mse, loss_ce + alpha * loss_mse


def _check(out, logits, targets, weight):
    ref_ce, ref_mse, ref_total = _reference(logits, targets, weight)
    np.testing.assert_allclose(float(out["loss_ce"]), float(ref_ce), rtol=1e-4, atol=1e-5)
    np.testing.assert_allclose(float(out["loss_mse"]), float(ref_mse), rtol=1e-4, atol=1e-5)
    np.testing.assert_allclose(float(out["loss_total"]), float(ref_total), rtol=1e-4, atol=1e-5)


if __name__ == "__main__":
    key = jax.random.PRNGKey(0)

    def _make(B, T, C, salt):
        k1, k2 = jax.random.split(jax.random.fold_in(key, salt))
        logits = jax.random.normal(k1, (B, T, C), dtype=jnp.float32)
        targets = jax.random.randint(k2, (B, T), 0, C, dtype=jnp.int32)
        targets = targets.at[0, min(3, T - 1)].set(IGNORE_INDEX)  # exercise ignore_index
        weight = jnp.linspace(0.5, 1.5, C, dtype=jnp.float32)
        return logits, targets, weight

    # 1) tiny sequence: whole T in a single block (concat shift path)
    logits, targets, weight = _make(2, 8, 4, salt=1)
    out = jax.jit(ce_plus_mse)(logits, targets, weight)
    jax.block_until_ready(out["loss_total"])
    _check(out, logits, targets, weight)

    # 2) multi-tile with a masked tail: in-kernel transpose, roll path, carry
    logits, targets, weight = _make(2, 300, 6, salt=2)
    out = jax.jit(functools.partial(ce_plus_mse, time_tile=128))(logits, targets, weight)
    jax.block_until_ready(out["loss_total"])
    _check(out, logits, targets, weight)

    # 3) producer-native [B, C, T] layout (no in-kernel transpose)
    out = jax.jit(functools.partial(ce_plus_mse, logits_layout="bct", time_tile=128))(
        jnp.transpose(logits, (0, 2, 1)), targets, weight)
    jax.block_until_ready(out["loss_total"])
    _check(out, logits, targets, weight)

    print("KERNEL_OK")
</pallas_src>

<mosaic_0001>
module attributes {stable_mosaic.version = 11 : i64} {
  func.func @_ce_mse_kernel(%arg0: i32, %arg1: i32, %arg2: memref<1x1x8xf32, #tpu.memory_space<vmem>>, %arg3: memref<1x1x8xi32, #tpu.memory_space<vmem>>, %arg4: memref<1x8x4xf32, #tpu.memory_space<vmem>>, %arg5: memref<1x1x128xf32, #tpu.memory_space<vmem>>, %arg6: memref<1x8xf32, #tpu.memory_space<vmem>>, %arg7: memref<1x8xf32, #tpu.memory_space<vmem>>, %arg8: memref<4x1xf32, #tpu.memory_space<vmem>>) attributes {dimension_semantics = [#tpu.dimension_semantics<parallel>, #tpu.dimension_semantics<arbitrary>], iteration_bounds = array<i64: 2, 1>, scalar_prefetch = 0 : i64, scratch_operands = 3 : i64, tpu.core_type = #tpu.core_type<tc>, window_params = [{transform_indices = @transform_0, window_bounds = array<i64: 1, 1, 8>}, {transform_indices = @transform_1, window_bounds = array<i64: 1, 1, 8>}, {transform_indices = @transform_2, window_bounds = array<i64: 1, 8, 4>}, {transform_indices = @transform_3, window_bounds = array<i64: 1, 1, 128>}]} {
    %c0_i32 = arith.constant 0 : i32
    %0 = arith.cmpi eq, %arg1, %c0_i32 : i32
    %1 = arith.extui %0 : i1 to i32
    %c0_i32_0 = arith.constant 0 : i32
    %2 = arith.cmpi ne, %1, %c0_i32_0 : i32
    scf.if %2 {
      %cst_30 = arith.constant 0.000000e+00 : f32
      %54 = vector.broadcast %cst_30 : f32 to vector<1x8xf32>
      %c0_31 = arith.constant 0 : index
      %c0_32 = arith.constant 0 : index
      %55 = vector.load %arg6[%c0_31, %c0_32] : memref<1x8xf32, #tpu.memory_space<vmem>>, vector<1x8xf32>
      tpu.vector_store %arg6[%c0_31, %c0_32], %54 {strides = array<i32>} : memref<1x8xf32, #tpu.memory_space<vmem>>, vector<1x8xf32>,
      %cst_33 = arith.constant 0.000000e+00 : f32
      %56 = vector.broadcast %cst_33 : f32 to vector<1x8xf32>
      %c0_34 = arith.constant 0 : index
      %c0_35 = arith.constant 0 : index
      %57 = vector.load %arg7[%c0_34, %c0_35] : memref<1x8xf32, #tpu.memory_space<vmem>>, vector<1x8xf32>
      tpu.vector_store %arg7[%c0_34, %c0_35], %56 {strides = array<i32>} : memref<1x8xf32, #tpu.memory_space<vmem>>, vector<1x8xf32>,
    } else {
    }
    %c0 = arith.constant 0 : index
    %c0_1 = arith.constant 0 : index
    %c0_2 = arith.constant 0 : index
    %3 = vector.load %arg4[%c0, %c0_1, %c0_2] : memref<1x8x4xf32, #tpu.memory_space<vmem>>, vector<1x8x4xf32>
    %4 = vector.shape_cast %3 : vector<1x8x4xf32> to vector<8x4xf32>
    %5 = tpu.transpose %4, [1, 0] : vector<8x4xf32> -> vector<4x8xf32>
    %cst = arith.constant dense<0xFF800000> : vector<8xf32>
    %6 = vector.multi_reduction <maximumf>, %5, %cst [0] : vector<4x8xf32> to vector<8xf32>
    %7 = vector.shape_cast %6 : vector<8xf32> to vector<1x8xf32>
    %8 = vector.broadcast %7 : vector<1x8xf32> to vector<4x8xf32>
    %9 = arith.subf %5, %8 : vector<4x8xf32>
    %10 = math.exp %9 : vector<4x8xf32>
    %cst_3 = arith.constant dense<0.000000e+00> : vector<8xf32>
    %11 = vector.multi_reduction <add>, %10, %cst_3 [0] : vector<4x8xf32> to vector<8xf32>
    %12 = vector.shape_cast %11 : vector<8xf32> to vector<1x8xf32>
    %13 = math.log %12 : vector<1x8xf32>
    %14 = vector.broadcast %13 : vector<1x8xf32> to vector<4x8xf32>
    %15 = arith.subf %9, %14 : vector<4x8xf32>
    %16 = tpu.iota {dimensions = array<i32: 0>} : vector<4x1xi32>
    %c0_4 = arith.constant 0 : index
    %c0_5 = arith.constant 0 : index
    %c0_6 = arith.constant 0 : index
    %17 = vector.load %arg3[%c0_4, %c0_5, %c0_6] : memref<1x1x8xi32, #tpu.memory_space<vmem>>, vector<1x1x8xi32>
    %18 = vector.shape_cast %17 : vector<1x1x8xi32> to vector<1x8xi32>
    %19 = vector.broadcast %16 : vector<4x1xi32> to vector<4x8xi32>
    %20 = vector.broadcast %18 : vector<1x8xi32> to vector<4x8xi32>
    %21 = arith.cmpi eq, %19, %20 : vector<4x8xi32>
    %cst_7 = arith.constant 0.000000e+00 : f32
    %22 = vector.broadcast %cst_7 : f32 to vector<4x8xf32>
    %23 = arith.select %21, %15, %22 : vector<4x8xi1>, vector<4x8xf32>
    %cst_8 = arith.constant dense<0.000000e+00> : vector<8xf32>
    %24 = vector.multi_reduction <add>, %23, %cst_8 [0] : vector<4x8xf32> to vector<8xf32>
    %25 = vector.shape_cast %24 : vector<8xf32> to vector<1x8xf32>
    %cst_9 = arith.constant 0.000000e+00 : f32
    %26 = vector.broadcast %cst_9 : f32 to vector<1x8xf32>
    %27 = arith.subf %26, %25 : vector<1x8xf32>
    %c0_10 = arith.constant 0 : index
    %c0_11 = arith.constant 0 : index
    %c0_12 = arith.constant 0 : index
    %28 = vector.load %arg2[%c0_10, %c0_11, %c0_12] : memref<1x1x8xf32, #tpu.memory_space<vmem>>, vector<1x1x8xf32>
    %29 = vector.shape_cast %28 : vector<1x1x8xf32> to vector<1x8xf32>
    %30 = arith.mulf %29, %27 : vector<1x8xf32>
    %c0_i32_13 = arith.constant 0 : i32
    %31 = arith.cmpi eq, %arg1, %c0_i32_13 : i32
    %32 = vector.extract_strided_slice %15 {offsets = [0, 0], sizes = [4, 1], strides = [1, 1]} : vector<4x8xf32> to vector<4x1xf32>
    %c0_14 = arith.constant 0 : index
    %c0_15 = arith.constant 0 : index
    %33 = vector.load %arg8[%c0_14, %c0_15] : memref<4x1xf32, #tpu.memory_space<vmem>>, vector<4x1xf32>
    %34 = arith.select %31, %32, %33 : vector<4x1xf32>
    %35 = vector.extract_strided_slice %15 {offsets = [0, 0], sizes = [4, 7], strides = [1, 1]} : vector<4x8xf32> to vector<4x7xf32>
    %36 = tpu.concatenate %34, %35 in 1 : vector<4x1xf32>, vector<4x7xf32> -> vector<4x8xf32>
    %37 = arith.subf %15, %36 : vector<4x8xf32>
    %38 = arith.mulf %37, %37 : vector<4x8xf32>
    %cst_16 = arith.constant 1.600000e+02 : f32
    %39 = vector.broadcast %cst_16 : f32 to vector<4x8xf32>
    %40 = arith.minimumf %38, %39 : vector<4x8xf32>
    %cst_17 = arith.constant dense<0.000000e+00> : vector<8xf32>
    %41 = vector.multi_reduction <add>, %40, %cst_17 [0] : vector<4x8xf32> to vector<8xf32>
    %42 = vector.shape_cast %41 : vector<8xf32> to vector<1x8xf32>
    %c0_18 = arith.constant 0 : index
    %c0_19 = arith.constant 0 : index
    %43 = vector.load %arg6[%c0_18, %c0_19] : memref<1x8xf32, #tpu.memory_space<vmem>>, vector<1x8xf32>
    %44 = arith.addf %43, %30 : vector<1x8xf32>
    %c0_20 = arith.constant 0 : index
    %c0_21 = arith.constant 0 : index
    %45 = vector.load %arg6[%c0_20, %c0_21] : memref<1x8xf32, #tpu.memory_space<vmem>>, vector<1x8xf32>
    tpu.vector_store %arg6[%c0_20, %c0_21], %44 {strides = array<i32>} : memref<1x8xf32, #tpu.memory_space<vmem>>, vector<1x8xf32>,
    %c0_22 = arith.constant 0 : index
    %c0_23 = arith.constant 0 : index
    %46 = vector.load %arg7[%c0_22, %c0_23] : memref<1x8xf32, #tpu.memory_space<vmem>>, vector<1x8xf32>
    %47 = arith.addf %46, %42 : vector<1x8xf32>
    %c0_24 = arith.constant 0 : index
    %c0_25 = arith.constant 0 : index
    %48 = vector.load %arg7[%c0_24, %c0_25] : memref<1x8xf32, #tpu.memory_space<vmem>>, vector<1x8xf32>
    tpu.vector_store %arg7[%c0_24, %c0_25], %47 {strides = array<i32>} : memref<1x8xf32, #tpu.memory_space<vmem>>, vector<1x8xf32>,
    %49 = vector.extract_strided_slice %15 {offsets = [0, 7], sizes = [4, 1], strides = [1, 1]} : vector<4x8xf32> to vector<4x1xf32>
    %c0_26 = arith.constant 0 : index
    %c0_27 = arith.constant 0 : index
    %50 = vector.load %arg8[%c0_26, %c0_27] : memref<4x1xf32, #tpu.memory_space<vmem>>, vector<4x1xf32>
    tpu.vector_store %arg8[%c0_26, %c0_27], %49 {strides = array<i32>} : memref<4x1xf32, #tpu.memory_space<vmem>>, vector<4x1xf32>,
    %c0_i32_28 = arith.constant 0 : i32
    %51 = arith.cmpi eq, %arg1, %c0_i32_28 : i32
    %52 = arith.extui %51 : i1 to i32
    %c0_i32_29 = arith.constant 0 : i32
    %53 = arith.cmpi ne, %52, %c0_i32_29 : i32
    scf.if %53 {
      %54 = tpu.iota {dimensions = array<i32: 1>} : vector<1x128xi32>
      %c0_30 = arith.constant 0 : index
      %c0_31 = arith.constant 0 : index
      %55 = vector.load %arg6[%c0_30, %c0_31] : memref<1x8xf32, #tpu.memory_space<vmem>>, vector<1x8xf32>
      %56 = vector.shape_cast %55 : vector<1x8xf32> to vector<1x1x8xf32>
      %cst_32 = arith.constant dense<0.000000e+00> : vector<1xf32>
      %57 = vector.multi_reduction <add>, %56, %cst_32 [1, 2] : vector<1x1x8xf32> to vector<1xf32>
      %58 = vector.shape_cast %57 : vector<1xf32> to vector<1x1x1xf32>
      %59 = vector.extract %58[0, 0, 0] : f32 from vector<1x1x1xf32>
      %c0_33 = arith.constant 0 : index
      %c0_34 = arith.constant 0 : index
      %60 = vector.load %arg7[%c0_33, %c0_34] : memref<1x8xf32, #tpu.memory_space<vmem>>, vector<1x8xf32>
      %61 = vector.shape_cast %60 : vector<1x8xf32> to vector<1x1x8xf32>
      %cst_35 = arith.constant dense<0.000000e+00> : vector<1xf32>
      %62 = vector.multi_reduction <add>, %61, %cst_35 [1, 2] : vector<1x1x8xf32> to vector<1xf32>
      %63 = vector.shape_cast %62 : vector<1xf32> to vector<1x1x1xf32>
      %64 = vector.extract %63[0, 0, 0] : f32 from vector<1x1x1xf32>
      %c0_i32_36 = arith.constant 0 : i32
      %65 = vector.broadcast %c0_i32_36 : i32 to vector<1x128xi32>
      %66 = arith.cmpi eq, %54, %65 : vector<1x128xi32>
      %c1_i32 = arith.constant 1 : i32
      %67 = vector.broadcast %c1_i32 : i32 to vector<1x128xi32>
      %68 = arith.cmpi eq, %54, %67 : vector<1x128xi32>
      %cst_37 = arith.constant 0.000000e+00 : f32
      %69 = vector.broadcast %64 : f32 to vector<1x128xf32>
      %70 = vector.broadcast %cst_37 : f32 to vector<1x128xf32>
      %71 = arith.select %68, %69, %70 : vector<1x128xi1>, vector<1x128xf32>
      %72 = vector.broadcast %59 : f32 to vector<1x128xf32>
      %73 = arith.select %66, %72, %71 : vector<1x128xi1>, vector<1x128xf32>
      %c0_38 = arith.constant 0 : index
      %c0_39 = arith.constant 0 : index
      %c0_40 = arith.constant 0 : index
      %74 = vector.load %arg5[%c0_38, %c0_39, %c0_40] : memref<1x1x128xf32, #tpu.memory_space<vmem>>, vector<1x1x128xf32>
      %75 = vector.shape_cast %74 : vector<1x1x128xf32> to vector<1x128xf32>
      %76 = vector.shape_cast %73 : vector<1x128xf32> to vector<1x1x128xf32>
      tpu.vector_store %arg5[%c0_38, %c0_39, %c0_40], %76 {strides = array<i32>} : memref<1x1x128xf32, #tpu.memory_space<vmem>>, vector<1x1x128xf32>,
    } else {
    }
    return
  }
  func.func @transform_0(%arg0: i32, %arg1: i32) -> (i32, i32, i32) {
    %c0_i32 = arith.constant 0 : i32
    %c0_i32_0 = arith.constant 0 : i32
    return %arg0, %c0_i32, %arg1 : i32, i32, i32
  }
  func.func @transform_1(%arg0: i32, %arg1: i32) -> (i32, i32, i32) {
    %c0_i32 = arith.constant 0 : i32
    %c0_i32_0 = arith.constant 0 : i32
    return %arg0, %c0_i32, %arg1 : i32, i32, i32
  }
  func.func @transform_2(%arg0: i32, %arg1: i32) -> (i32, i32, i32) {
    %c0_i32 = arith.constant 0 : i32
    %c0_i32_0 = arith.constant 0 : i32
    return %arg0, %arg1, %c0_i32 : i32, i32, i32
  }
  func.func @transform_3(%arg0: i32, %arg1: i32) -> (i32, i32, i32) {
    %c0_i32 = arith.constant 0 : i32
    %c0_i32_0 = arith.constant 0 : i32
    %c0_i32_1 = arith.constant 0 : i32
    return %arg0, %c0_i32, %c0_i32_0 : i32, i32, i32
  }
}

</mosaic_0001>

<llo_original>
// kernel: ce_plus_mse.1
$region0: #{ce_plus_mse.1}
  #allocation0 [shape = 'u32[]', space=smem, size = 0x4, offset = 0x4, fixed_abs, tag = 'smem constant byte address 0x4 - core index']
  #allocation1 [shape = 'u32[144,128]{1,0:T(1,128)}', space=vmem, size = 0x12000, scoped, tag = 'internal scratch']
  #allocation2 [shape = 'f32[1,8]{1,0:T(1,128)}', space=vmem, size = 0x200, scoped, tag = 'scratch operand']
  #allocation3 [shape = 'f32[1,8]{1,0:T(1,128)}', space=vmem, size = 0x200, scoped, tag = 'scratch operand']
  #allocation4 [shape = 'f32[4,1]{1,0:T(4,128)}', space=vmem, size = 0x800, scoped, tag = 'scratch operand']
  %s0 = inlined_call_operand.vmem [shape: f32[2,1,8], index: 0, kind: input, shape index: {}]
  %s1 = inlined_call_operand.vmem [shape: s32[2,1,8], index: 1, kind: input, shape index: {}]
  %s2 = inlined_call_operand.vmem [shape: f32[2,8,4], index: 2, kind: input, shape index: {}]
  %s3 = inlined_call_operand.vmem [shape: f32[2,1,128], index: 3, kind: output, shape index: {}]
  %s4 = sld [smem:[#allocation0]]
  $region53: #{ce_plus_mse.1} parent=0
    _
  %s6 = ssub.s32 1, %s4
  %s7 = scalar_select 0, %s6, %s4
  loop: start=0, step=1, limit=4
  $region2: #{ce_plus_mse.1} parent=0 // loop_pre_header
    _
  $region3: #{ce_plus_mse.1} parent=0 // loop_header
    %s9 = sphi 0, %s13
    %p10 = scmp.ge.s32.totalorder %s9, 4
    %s16 = sphi 0, %s28
    %s17 = sphi 0, %s24
    %s18 = sphi 0, %s16
    %s19 = sphi 0, %s17
    %s20 = sphi 0, %s18
    %s21 = sphi 0, %s19
    %s33 = sphi 0, %s35
    %s36 = sphi 0, %s33
    %s37 = sphi 0, %s36
    %s53 = sphi 0, %s37
    %s61 = sphi 0, %s63
    %s64 = sphi 0, %s61
    %s65 = sphi 0, %s64
    %s81 = sphi 0, %s65
    %s89 = sphi 0, %s91
    %s92 = sphi 0, %s89
    %s93 = sphi 0, %s92
    %s109 = sphi 0, %s93
    %s115 = sphi 0, %s117
    %s118 = sphi 0, %s115
    %s119 = sphi 0, %s118
    %s135 = sphi 0, %s119
  $region4: #{ce_plus_mse.1} parent=0 // loop_header_branch
    %12 = sbr.rel (%p10) target = $region8
  $region5: #{ce_plus_mse.1} parent=0 // loop_body
    %s14 = ssub.s32 %s9, 1
    %s15 = ssub.s32 %s9, 2
    %s22 = sadd.s32 1, %s17
    %p23 = scmp.ge.s32.totalorder %s22, 1
    %s24 = scalar_select %p23, 0, %s22
    %s25 = sadd.s32 1, %s16
    %s26 = scalar_select %p23, %s25, %s16
    %p27 = scmp.ge.s32.totalorder %s26, 2
    %s28 = scalar_select %p27, 0, %s26
    %s29 = ssub.s32 %s16, %s28
    %s30 = ssub.s32 %s17, %s24
    %s31 = sor.u32 %s29, %s30
    %p32 = scmp.eq.s32.totalorder %s31, 0
    %s34 = sadd.s32 %s33, 1
    %s35 = scalar_select %p32, %s33, %s34
    %p38 = pneg %p32
    %p39 = scmp.eq.s32.totalorder %s9, 1
    %p40 = por %p38, %p39
    %p41 = scmp.ne.s32.totalorder %s33, %s36
    %p42 = scmp.eq.s32.totalorder %s9, 0
    %p43 = por %p41, %p42
    %p44 = scmp.ne.s32.totalorder %s33, %s36
    %p45 = scmp.eq.s32.totalorder %s14, 1
    %p46 = por %p44, %p45
    %p47 = scmp.ne.s32.totalorder %s36, %s37
    %p48 = scmp.eq.s32.totalorder %s14, 0
    %p49 = por %p47, %p48
    %p50 = scmp.ne.s32.totalorder %s36, %s37
    %p51 = scmp.eq.s32.totalorder %s15, 1
    %p52 = por %p50, %p51
    %p54 = scmp.ne.s32.totalorder %s37, %s53
    %p55 = scmp.eq.s32.totalorder %s15, 0
    %p56 = por %p54, %p55
    %s57 = ssub.s32 %s16, %s28
    %s58 = ssub.s32 %s17, %s24
    %s59 = sor.u32 %s57, %s58
    %p60 = scmp.eq.s32.totalorder %s59, 0
    %s62 = sadd.s32 %s61, 1
    %s63 = scalar_select %p60, %s61, %s62
    %p66 = pneg %p60
    %p67 = scmp.eq.s32.totalorder %s9, 1
    %p68 = por %p66, %p67
    %p69 = scmp.ne.s32.totalorder %s61, %s64
    %p70 = scmp.eq.s32.totalorder %s9, 0
    %p71 = por %p69, %p70
    %p72 = scmp.ne.s32.totalorder %s61, %s64
    %p73 = scmp.eq.s32.totalorder %s14, 1
    %p74 = por %p72, %p73
    %p75 = scmp.ne.s32.totalorder %s64, %s65
    %p76 = scmp.eq.s32.totalorder %s14, 0
    %p77 = por %p75, %p76
    %p78 = scmp.ne.s32.totalorder %s64, %s65
    %p79 = scmp.eq.s32.totalorder %s15, 1
    %p80 = por %p78, %p79
    %p82 = scmp.ne.s32.totalorder %s65, %s81
    %p83 = scmp.eq.s32.totalorder %s15, 0
    %p84 = por %p82, %p83
    %s85 = ssub.s32 %s16, %s28
    %s86 = ssub.s32 %s17, %s24
    %s87 = sor.u32 %s85, %s86
    %p88 = scmp.eq.s32.totalorder %s87, 0
    %s90 = sadd.s32 %s89, 1
    %s91 = scalar_select %p88, %s89, %s90
    %p94 = pneg %p88
    %p95 = scmp.eq.s32.totalorder %s9, 1
    %p96 = por %p94, %p95
    %p97 = scmp.ne.s32.totalorder %s89, %s92
    %p98 = scmp.eq.s32.totalorder %s9, 0
    %p99 = por %p97, %p98
    %p100 = scmp.ne.s32.totalorder %s89, %s92
    %p101 = scmp.eq.s32.totalorder %s14, 1
    %p102 = por %p100, %p101
    %p103 = scmp.ne.s32.totalorder %s92, %s93
    %p104 = scmp.eq.s32.totalorder %s14, 0
    %p105 = por %p103, %p104
    %p106 = scmp.ne.s32.totalorder %s92, %s93
    %p107 = scmp.eq.s32.totalorder %s15, 1
    %p108 = por %p106, %p107
    %p110 = scmp.ne.s32.totalorder %s93, %s109
    %p111 = scmp.eq.s32.totalorder %s15, 0
    %p112 = por %p110, %p111
    %s113 = ssub.s32 %s16, %s28
    %p114 = scmp.eq.s32.totalorder %s113, 0
    %s116 = sadd.s32 %s115, 1
    %s117 = scalar_select %p114, %s115, %s116
    %p120 = pneg %p114
    %p121 = scmp.eq.s32.totalorder %s9, 1
    %p122 = por %p120, %p121
    %p123 = scmp.ne.s32.totalorder %s115, %s118
    %p124 = scmp.eq.s32.totalorder %s9, 0
    %p125 = por %p123, %p124
    %p126 = scmp.ne.s32.totalorder %s115, %s118
    %p127 = scmp.eq.s32.totalorder %s14, 1
    %p128 = por %p126, %p127
    %p129 = scmp.ne.s32.totalorder %s118, %s119
    %p130 = scmp.eq.s32.totalorder %s14, 0
    %p131 = por %p129, %p130
    %p132 = scmp.ne.s32.totalorder %s118, %s119
    %p133 = scmp.eq.s32.totalorder %s15, 1
    %p134 = por %p132, %p133
    %p136 = scmp.ne.s32.totalorder %s119, %s135
    %p137 = scmp.eq.s32.totalorder %s15, 0
    %p138 = por %p136, %p137
    %p139 = scmp.le.s32.totalorder 1, %s9
    %p140 = scmp.lt.s32.totalorder %s9, 3
    %p141 = pnand %p139, %p140
    %p142 = pneg %p141
    // Predicated region
    $region9: #{ce_plus_mse.1} parent=5 // pred_check
      _
    $region10: #{ce_plus_mse.1} parent=5 // pred_check_branch
      %144 = sbr.rel (%p141) target = $region12
    $region11: #{ce_plus_mse.1} parent=5 // pred_region
      %s145 = ssub.s32 %s9, 1
    $region12: #{ce_plus_mse.1} parent=5 // pred_fallthru
      _
    %p146 = scmp.lt.s32.totalorder %s9, 2
    // Predicated region
    $region13: #{ce_plus_mse.1} parent=5 // pred_check
      %p147 = pneg %p146
    $region14: #{ce_plus_mse.1} parent=5 // pred_check_branch
      %149 = sbr.rel (%p147) target = $region16
    $region15: #{ce_plus_mse.1} parent=5 // pred_region
      // Predicated region
      $region17: #{ce_plus_mse.1} parent=15 // pred_check
        %p150 = pneg %p43
      $region18: #{ce_plus_mse.1} parent=15 // pred_check_branch
        %152 = sbr.rel (%p150) target = $region20
      $region19: #{ce_plus_mse.1} parent=15 // pred_region
        %p153 = scmp.lt.s32.totalorder %s16, 1
        %s154 = scalar_select %p153, %s16, 1
        %p155 = scmp.lt.s32.totalorder %s17, 0
        %s156 = scalar_select %p155, %s17, 0
        %s157 = sadd.s32 %s156, %s154
        %s158 = scalar_lea.vmem %s0, %s157
      $region20: #{ce_plus_mse.1} parent=15 // pred_fallthru
        _
      // Predicated region
      $region21: #{ce_plus_mse.1} parent=15 // pred_check
        %p159 = pneg %p71
      $region22: #{ce_plus_mse.1} parent=15 // pred_check_branch
        %161 = sbr.rel (%p159) target = $region24
      $region23: #{ce_plus_mse.1} parent=15 // pred_region
        %p162 = scmp.lt.s32.totalorder %s16, 1
        %s163 = scalar_select %p162, %s16, 1
        %p164 = scmp.lt.s32.totalorder %s17, 0
        %s165 = scalar_select %p164, %s17, 0
        %s166 = sadd.s32 %s165, %s163
        %s167 = scalar_lea.vmem %s1, %s166
      $region24: #{ce_plus_mse.1} parent=15 // pred_fallthru
        _
      // Predicated region
      $region25: #{ce_plus_mse.1} parent=15 // pred_check
        %p168 = pneg %p99
      $region26: #{ce_plus_mse.1} parent=15 // pred_check_branch
        %170 = sbr.rel (%p168) target = $region28
      $region27: #{ce_plus_mse.1} parent=15 // pred_region
        %p171 = scmp.lt.s32.totalorder %s16, 1
        %s172 = scalar_select %p171, %s16, 1
        %p173 = scmp.lt.s32.totalorder %s17, 0
        %s174 = scalar_select %p173, %s17, 0
        %s175 = sadd.s32 %s174, %s172
        %s176 = smul.addr %s175, 8
        %s177 = scalar_lea.vmem %s2, %s176
      $region28: #{ce_plus_mse.1} parent=15 // pred_fallthru
        _
    $region16: #{ce_plus_mse.1} parent=5 // pred_fallthru
      _
    %p178 = scmp.le.s32.totalorder 1, %s9
    %p179 = scmp.lt.s32.totalorder %s9, 3
    %p180 = pnand %p178, %p179
    %p181 = pneg %p180
    // Predicated region
    $region29: #{ce_plus_mse.1} parent=5 // pred_check
      _
    $region30: #{ce_plus_mse.1} parent=5 // pred_check_branch
      %183 = sbr.rel (%p180) target = $region32
    $region31: #{ce_plus_mse.1} parent=5 // pred_region
      %s184 = ssub.s32 %s9, 1
      %p185 = scmp.lt.s32.totalorder %s18, 1
      %s186 = scalar_select %p185, %s18, 1
      %p187 = scmp.lt.s32.totalorder %s19, 0
      %s188 = scalar_select %p187, %s19, 0
      %s189 = sadd.s32 %s188, %s186
      %s190 = scalar_lea.vmem %s0, %s189
      %p191 = pneg %p49
      %p192 = pneg %p46
      %p193 = scmp.lt.s32.totalorder %s18, 1
      %s194 = scalar_select %p193, %s18, 1
      %p195 = scmp.lt.s32.totalorder %s19, 0
      %s196 = scalar_select %p195, %s19, 0
      %s197 = sadd.s32 %s196, %s194
      %s198 = scalar_lea.vmem %s1, %s197
      %p199 = pneg %p77
      %p200 = pneg %p74
      %p201 = scmp.lt.s32.totalorder %s18, 1
      %s202 = scalar_select %p201, %s18, 1
      %p203 = scmp.lt.s32.totalorder %s19, 0
      %s204 = scalar_select %p203, %s19, 0
      %s205 = sadd.s32 %s204, %s202
      %s206 = smul.addr %s205, 8
      %s207 = scalar_lea.vmem %s2, %s206
      %p208 = pneg %p105
      %p209 = pneg %p102
      %p210 = pneg %p131
      %p211 = pneg %p128
      %p212 = scmp.lt.s32.totalorder %s18, 1
      %s213 = scalar_select %p212, %s18, 1
      %s214 = scalar_lea.vmem %s3, %s213
      %p215 = scmp.lt.s32.totalorder %s18, 1
      %s216 = scalar_select %p215, %s18, 1
      %p217 = scmp.lt.s32.totalorder %s19, 0
      %s218 = scalar_select %p217, %s19, 0
      %s219 = sadd.s32 %s218, %s216
      %s220 = scalar_lea.vmem %s0, %s219
      %p221 = scmp.lt.s32.totalorder %s18, 1
      %s222 = scalar_select %p221, %s18, 1
      %p223 = scmp.lt.s32.totalorder %s19, 0
      %s224 = scalar_select %p223, %s19, 0
      %s225 = sadd.s32 %s224, %s222
      %s226 = scalar_lea.vmem %s1, %s225
      %p227 = scmp.lt.s32.totalorder %s18, 1
      %s228 = scalar_select %p227, %s18, 1
      %p229 = scmp.lt.s32.totalorder %s19, 0
      %s230 = scalar_select %p229, %s19, 0
      %s231 = sadd.s32 %s230, %s228
      %s232 = smul.addr %s231, 8
      %s233 = scalar_lea.vmem %s2, %s232
      %p234 = scmp.lt.s32.totalorder %s18, 1
      %s235 = scalar_select %p234, %s18, 1
      %s236 = scalar_lea.vmem %s3, %s235
      %p237 = scmp.eq.s32.totalorder %s19, 0
      // Predicated region
      $region33: #{ce_plus_mse.1} parent=31 // pred_check
        %p238 = pneg %p237
      $region34: #{ce_plus_mse.1} parent=31 // pred_check_branch
        %240 = sbr.rel (%p238) target = $region36
      $region35: #{ce_plus_mse.1} parent=31 // pred_region
        %vm241 = vcmask 57344
        %242 = vst.msk [vmem:[#allocation2] sm:$0x1] %vm241, 0.0
        %243 = vst.msk [vmem:[#allocation3] sm:$0x1] %vm241, 0.0
      $region36: #{ce_plus_mse.1} parent=31 // pred_fallthru
        _
      %v244 = vld [vmem:[%s233] sm:$0xff]
      %245 = vxpose.xlu0.b32.start [1/16] %v244, 128
      %246 = vxpose.xlu0.b32.cont [2/16] 0.0, 128
      %247 = vxpose.xlu0.b32.cont [3/16] 0.0, 128
      %248 = vxpose.xlu0.b32.cont [4/16] 0.0, 128
      %249 = vxpose.xlu0.b32.cont [5/16] 0.0, 128
      %250 = vxpose.xlu0.b32.cont [6/16] 0.0, 128
      %251 = vxpose.xlu0.b32.cont [7/16] 0.0, 128
      %252 = vxpose.xlu0.b32.cont [8/16] 0.0, 128
      %253 = vxpose.xlu0.b32.cont [9/16] 0.0, 128
      %254 = vxpose.xlu0.b32.cont [10/16] 0.0, 128
      %255 = vxpose.xlu0.b32.cont [11/16] 0.0, 128
      %256 = vxpose.xlu0.b32.cont [12/16] 0.0, 128
      %257 = vxpose.xlu0.b32.cont [13/16] 0.0, 128
      %258 = vxpose.xlu0.b32.cont [14/16] 0.0, 128
      %259 = vxpose.xlu0.b32.cont [15/16] 0.0, 128
      %260 = vxpose.xlu0.b32.end [16/16] 0.0, 128
      %v261 = vpop.trf.xlu0
      %v262 = vpop.trf.xlu0
      %v263 = vpop.trf.xlu0
      %v264 = vpop.trf.xlu0
      %v265 = vpop.trf.xlu0
      %v266 = vpop.trf.xlu0
      %v267 = vpop.trf.xlu0
      %v268 = vpop.trf.xlu0
      %v269 = vpop.trf.xlu0
      %v270 = vpop.trf.xlu0
      %v271 = vpop.trf.xlu0
      %v272 = vpop.trf.xlu0
      %v273 = vpop.trf.xlu0
      %v274 = vpop.trf.xlu0
      %v275 = vpop.trf.xlu0
      %v276 = vpop.trf.xlu0
      %vm277 = vcmask 60416
      %v278 = vsel %vm277, %v261, -inf
      %v279 = vrot.slane %v278, 4
      %v280 = vmax.f32 %v278, %v279
      %v281 = vrot.slane %v280, 2
      %v282 = vmax.f32 %v280, %v281
      %v283 = vrot.slane %v282, 1
      %v284 = vmax.f32 %v282, %v283
      %v285 = vsub.f32 %v261, %v284
      %v286 = vmul.f32 %v285, 1.442695
      %v287 = vpow.pop %v286
      %v288 = vsel %vm277, %v287, 0.0
      %v289 = vrot.slane %v288, 4
      %v290 = vadd.f32 %v288, %v289
      %v291 = vrot.slane %v290, 2
      %v292 = vadd.f32 %v290, %v291
      %v293 = vrot.slane %v292, 1
      %v294 = vadd.f32 %v292, %v293
      %v295 = vlog2.pop %v294
      %v296 = vmul.f32 %v295, 0.6931472
      %v297 = vsub.f32 %v285, %v296
      %v298 = vlaneseq
      %v299 = vshrl.u32 %v298, 7
      %v300 = vld [vmem:[%s226] sm:$0x1]
      %v301 = vlaneseq
      %v302 = vshrl.u32 %v301, 7
      %v303 = vsub.s32 0, %v302
      %v304 = vrot.slane %v300, %v303
      %vm305 = vcmp.eq.s32.totalorder %v299, %v304
      %v306 = vsel %vm305, %v297, 0.0
      %v307 = vsel %vm277, %v306, 0.0
      %v308 = vrot.slane %v307, 4
      %v309 = vadd.f32 %v307, %v308
      %v310 = vrot.slane %v309, 2
      %v311 = vadd.f32 %v309, %v310
      %v312 = vrot.slane %v311, 1
      %v313 = vadd.f32 %v311, %v312
      %v314 = vsub.f32 0.0, %v313
      %v315 = vld [vmem:[%s220] sm:$0x1]
      %v316 = vmul.f32 %v315, %v314
      %v317 = vld [vmem:[#allocation4] sm:$0xf]
      %s318 = scalar_select %p237, 1, 0
      %v319 = vstv %s318
      %vm320 = vcmp.eq.s32.totalorder %v319, 1
      %v321 = vsel %vm320, %v297, %v317
      %323 = vrot.lane.b32.xlu0 %v297, 1
      %v324 = vpop.permute.xlu0 %323
      %vm326 = vcmask 7168
      %v327 = vsel %vm326, %v321, %v324
      %v328 = vsub.f32 %v297, %v327
      %v329 = vmul.f32 %v328, %v328
      %v330 = vmin.f32 %v329, 160.0
      %v331 = vsel %vm277, %v330, 0.0
      %v332 = vrot.slane %v331, 4
      %v333 = vadd.f32 %v331, %v332
      %v334 = vrot.slane %v333, 2
      %v335 = vadd.f32 %v333, %v334
      %v336 = vrot.slane %v335, 1
      %v337 = vadd.f32 %v335, %v336
      %v338 = vld [vmem:[#allocation2] sm:$0x1]
      %v339 = vadd.f32 %v338, %v316
      %vm340 = vcmask 57344
      %341 = vst.msk [vmem:[#allocation2] sm:$0x1] %vm340, %v339
      %v342 = vld [vmem:[#allocation3] sm:$0x1]
      %v343 = vadd.f32 %v342, %v337
      %344 = vst.msk [vmem:[#allocation3] sm:$0x1] %vm340, %v343
      %345 = vrot.lane.b32.xlu0 %v297, 121
      %v346 = vpop.permute.xlu0 %345
      %vm348 = vcmask 3072
      %349 = vst.msk [vmem:[#allocation4] sm:$0xf] %vm348, %v346
      // Predicated region
      $region37: #{ce_plus_mse.1} parent=31 // pred_check
        %p350 = pneg %p237
      $region38: #{ce_plus_mse.1} parent=31 // pred_check_branch
        %352 = sbr.rel (%p350) target = $region40
      $region39: #{ce_plus_mse.1} parent=31 // pred_region
        %v353 = vlaneseq
        %v354 = vand.u32 %v353, 127
        %v355 = vld [vmem:[#allocation2] sm:$0x1]
        %v356 = vsel %vm340, %v355, 0.0
        %357 = vadd.xlane.f32.xlu0 %v356
        %v358 = vpop.xlane.xlu0 %357
        %v359 = vrot.slane %v358, 4
        %v360 = vadd.f32 %v358, %v359
        %v361 = vrot.slane %v360, 2
        %v362 = vadd.f32 %v360, %v361
        %v363 = vrot.slane %v362, 1
        %v364 = vadd.f32 %v362, %v363
        %s365 = vtos %v364
        %v366 = vld [vmem:[#allocation3] sm:$0x1]
        %v367 = vsel %vm340, %v366, 0.0
        %368 = vadd.xlane.f32.xlu0 %v367
        %v369 = vpop.xlane.xlu0 %368
        %v370 = vrot.slane %v369, 4
        %v371 = vadd.f32 %v369, %v370
        %v372 = vrot.slane %v371, 2
        %v373 = vadd.f32 %v371, %v372
        %v374 = vrot.slane %v373, 1
        %v375 = vadd.f32 %v373, %v374
        %s376 = vtos %v375
        %vm377 = vcmp.eq.s32.totalorder %v354, 0
        %vm378 = vcmp.eq.s32.totalorder %v354, 1
        %v379 = vstv %s376
        %v380 = vsel %vm378, %v379, 0.0
        %v381 = vstv %s365
        %v382 = vsel %vm377, %v381, %v380
        %383 = vst [vmem:[%s236] sm:$0x1] %v382
      $region40: #{ce_plus_mse.1} parent=31 // pred_fallthru
        _
      %p384 = scmp.lt.s32.totalorder %s18, 1
      %s385 = scalar_select %p384, %s18, 1
      %s386 = scalar_lea.vmem %s3, %s385
      // Predicated region
      $region41: #{ce_plus_mse.1} parent=31 // pred_check
        %p387 = pneg %p128
      $region42: #{ce_plus_mse.1} parent=31 // pred_check_branch
        %389 = sbr.rel (%p387) target = $region44
      $region43: #{ce_plus_mse.1} parent=31 // pred_region
        _
      $region44: #{ce_plus_mse.1} parent=31 // pred_fallthru
        _
    $region32: #{ce_plus_mse.1} parent=5 // pred_fallthru
      _
    %p390 = scmp.le.s32.totalorder 2, %s9
    // Predicated region
    $region45: #{ce_plus_mse.1} parent=5 // pred_check
      %p391 = pneg %p390
    $region46: #{ce_plus_mse.1} parent=5 // pred_check_branch
      %393 = sbr.rel (%p391) target = $region48
    $region47: #{ce_plus_mse.1} parent=5 // pred_region
      %s394 = ssub.s32 %s9, 2
      // Predicated region
      $region49: #{ce_plus_mse.1} parent=47 // pred_check
        %p395 = pneg %p134
      $region50: #{ce_plus_mse.1} parent=47 // pred_check_branch
        %397 = sbr.rel (%p395) target = $region52
      $region51: #{ce_plus_mse.1} parent=47 // pred_region
        %p398 = scmp.lt.s32.totalorder %s20, 1
        %s399 = scalar_select %p398, %s20, 1
        %s400 = scalar_lea.vmem %s3, %s399
      $region52: #{ce_plus_mse.1} parent=47 // pred_fallthru
        _
    $region48: #{ce_plus_mse.1} parent=5 // pred_fallthru
      _
  $region6: #{ce_plus_mse.1} parent=0 // loop_footer
    %s13 = sadd.s32 1, %s9
  $region7: #{ce_plus_mse.1} parent=0 // loop_footer_branch
    %8 = sbr.rel target = $region3
  $region8: #{ce_plus_mse.1} parent=0 // loop_exit
    _

</llo_original>
